<compile_context>
chip_gen: v7x
topology: tpu7x:2x2x1
jax: 0.10.0
libtpu: 0.0.40
codegen_flags: <defaults>
</compile_context>

<pallas_src>
import functools
from typing import NamedTuple

import jax
import jax.numpy as jnp
from jax import lax
from jax.experimental import pallas as pl
from jax.experimental.pallas import tpu as pltpu

_LANE = 128
_SUBLANE = 8


def _round_up(n, m):
    return ((n + m - 1) // m) * m


def _choose_batch_tile(batch):
    # ~192 flops/row: this kernel is grid-step-overhead bound (~0.35 us/step),
    # so use one whole-batch tile for rollout-scale batches and 512-row tiles
    # beyond that (which also keeps nb>=2 for v7x's two TensorCores).
    if batch <= 512:
        return _round_up(max(batch, 1), _SUBLANE)
    return 512


def _make_policy_kernel(state_size, action_size, tb, h_pad, a_pad):
    """Kernel specialized to static sizes (closed over at trace time)."""

    def kernel(x_ref, w1_ref, b1_ref, w2t_ref, b2_ref, out_ref, h_sc):
        # ---- fc1: h = relu(x @ W1 + b1) -------------------------------------
        # VPU broadcast-MAC over the tiny K=state_size contraction (no MXU:
        # a 4x16 matmul would be >99% MXU padding + relayout).  Bias and the
        # first MAC are folded into the init; accumulate straight into VMEM
        # scratch so big batch tiles don't blow the register file.
        init = x_ref[:, 0:1] * w1_ref[0:1, :] + b1_ref[...]
        if state_size == 1:
            h_sc[...] = jnp.maximum(init, 0.0)
        else:
            h_sc[...] = init
            for k in range(1, state_size):                 # static unroll (K=4)
                term = x_ref[:, k:k + 1] * w1_ref[k:k + 1, :]
                if k == state_size - 1:
                    h_sc[...] = jnp.maximum(h_sc[...] + term, 0.0)
                else:
                    h_sc[...] = h_sc[...] + term

        # ---- fc2: logits via XLU lane reductions against W2^T ---------------
        # w2t_ref row j = W2[:, j] zero-padded to 128 lanes; h's padded lanes
        # are zero as well, so the cross-lane sum is exact.
        logit = []
        for j in range(action_size):                        # static unroll (2)
            lj = jnp.sum(h_sc[...] * w2t_ref[j:j + 1, :], axis=1, keepdims=True)
            logit.append(lj + b2_ref[:, j:j + 1])

        # ---- softmax over the action dim (exact arithmetic) ------------------
        lane = lax.broadcasted_iota(jnp.int32, (tb, a_pad), 1)
        if action_size == 2:
            # Sigmoid form: one EUP exp, full-precision divide, rows sum to 1.
            d = logit[1] - logit[0]
            p0 = 1.0 / (1.0 + jnp.exp(d))
            p1 = 1.0 - p0
            probs = jnp.where(lane == 0, p0, jnp.where(lane == 1, p1, 0.0))
        else:
            # General small-action-count path (not exercised for CartPole).
            m = logit[0]
            for j in range(1, action_size):
                m = jnp.maximum(m, logit[j])
            e = [jnp.exp(l - m) for l in logit]
            s = e[0]
            for j in range(1, action_size):
                s = s + e[j]
            inv = 1.0 / s
            probs = jnp.zeros((tb, a_pad), jnp.float32)
            for j in range(action_size):
                probs = jnp.where(lane == j, e[j] * inv, probs)

        # Single full-width (lane-dense) store of the (tb, 128) slab.
        out_ref[...] = probs.astype(out_ref.dtype)

    return kernel


class PolicyParams(NamedTuple):
    w1_p: jax.Array    # (s_pad, h_pad)    rows = W1 rows, zero padded
    b1_p: jax.Array    # (1, h_pad)
    w2t_p: jax.Array   # (a_rows, h_pad)   row j = W2[:, j], zero padded
    b2_p: jax.Array    # (1, a_pad)
    state_size: int
    h_size: int
    action_size: int


def prepare_params(w1, b1, w2, b2):
    """One-time padding / transposition of the policy weights.

    Hoisted out of the per-call hot path: weights are constant across a
    rollout, so the tiny per-call launch path only pads x.
    """
    state_size, h_size = w1.shape
    action_size = w2.shape[1]
    s_pad = _round_up(state_size, _SUBLANE)
    h_pad = _round_up(h_size, _LANE)
    a_pad = _round_up(action_size, _LANE)
    a_rows = _round_up(action_size, _SUBLANE)

    w1_p = jnp.zeros((s_pad, h_pad), jnp.float32).at[:state_size, :h_size].set(
        w1.astype(jnp.float32))
    b1_p = jnp.zeros((1, h_pad), jnp.float32).at[:, :h_size].set(
        b1.astype(jnp.float32).reshape(1, h_size))
    w2t_p = jnp.zeros((a_rows, h_pad), jnp.float32).at[:action_size, :h_size].set(
        w2.astype(jnp.float32).T)
    b2_p = jnp.zeros((1, a_pad), jnp.float32).at[:, :action_size].set(
        b2.astype(jnp.float32).reshape(1, action_size))
    return PolicyParams(w1_p, b1_p, w2t_p, b2_p, state_size, h_size, action_size)


@functools.partial(jax.jit,
                   static_argnames=("state_size", "h_size", "action_size"))
def _policy_forward_impl(x, w1_p, b1_p, w2t_p, b2_p, *,
                         state_size, h_size, action_size):
    x = x.astype(jnp.float32)
    batch = x.shape[0]
    assert x.shape[1] == state_size
    h_pad = w1_p.shape[1]
    a_pad = b2_p.shape[1]

    tb = _choose_batch_tile(batch)
    b_pad = _round_up(batch, tb)
    nb = b_pad // tb

    # Pad x: batch -> b_pad rows, features -> 128 lanes, so every tile the
    # kernel sees is a fully aligned (8k, 128m) rectangle.  Extra lanes are
    # never read; extra rows are sliced off below.
    x_p = jnp.zeros((b_pad, _LANE), jnp.float32).at[:batch, :state_size].set(x)

    kernel = _make_policy_kernel(state_size, action_size, tb, h_pad, a_pad)

    cost = pl.CostEstimate(
        flops=2 * b_pad * (state_size * h_pad + h_pad * action_size) + 8 * b_pad,
        transcendentals=b_pad * max(action_size - 1, 1),
        bytes_accessed=4 * (x_p.size + w1_p.size + b1_p.size + w2t_p.size
                            + b2_p.size + b_pad * a_pad),
    )

    out = pl.pallas_call(
        kernel,
        out_shape=jax.ShapeDtypeStruct((b_pad, a_pad), jnp.float32),
        grid_spec=pltpu.PrefetchScalarGridSpec(
            num_scalar_prefetch=0,
            grid=(nb,),
            in_specs=[
                pl.BlockSpec((tb, _LANE), lambda i: (i, 0)),       # x batch tile
                pl.BlockSpec(w1_p.shape, lambda i: (0, 0)),        # W1 (resident)
                pl.BlockSpec(b1_p.shape, lambda i: (0, 0)),        # b1
                pl.BlockSpec(w2t_p.shape, lambda i: (0, 0)),       # W2^T (resident)
                pl.BlockSpec(b2_p.shape, lambda i: (0, 0)),        # b2
            ],
            out_specs=pl.BlockSpec((tb, a_pad), lambda i: (i, 0)),  # lane-dense
            scratch_shapes=[
                pltpu.VMEM((tb, h_pad), jnp.float32),               # h scratch
            ],
        ),
        compiler_params=pltpu.CompilerParams(
            dimension_semantics=("parallel",)),                     # v7x megacore
        cost_estimate=cost,
    )(x_p, w1_p, b1_p, w2t_p, b2_p)

    return out[:batch, :action_size]


def policy_forward(x, params: PolicyParams):
    """softmax(relu(x @ W1 + b1) @ W2 + b2, axis=1) via a batched Pallas kernel."""
    return _policy_forward_impl(
        x, params.w1_p, params.b1_p, params.w2t_p, params.b2_p,
        state_size=params.state_size, h_size=params.h_size,
        action_size=params.action_size)


def init_params(key, state_size=4, h_size=16, action_size=2):
    # Deterministic synthetic init (uniform like PyTorch's default Linear init).
    k1, k2, k3, k4 = jax.random.split(key, 4)
    bound1 = 1.0 / float(state_size) ** 0.5
    bound2 = 1.0 / float(h_size) ** 0.5
    w1 = jax.random.uniform(k1, (state_size, h_size), jnp.float32, -bound1, bound1)
    b1 = jax.random.uniform(k2, (1, h_size), jnp.float32, -bound1, bound1)
    w2 = jax.random.uniform(k3, (h_size, action_size), jnp.float32, -bound2, bound2)
    b2 = jax.random.uniform(k4, (1, action_size), jnp.float32, -bound2, bound2)
    return w1, b1, w2, b2


def reference_forward(x, w1, b1, w2, b2):
    # HIGHEST precision so the reference is exact f32 (no bf16 matmul passes).
    h = jnp.maximum(jnp.dot(x, w1, precision=lax.Precision.HIGHEST) + b1, 0.0)
    logits = jnp.dot(h, w2, precision=lax.Precision.HIGHEST) + b2
    return jax.nn.softmax(logits, axis=1)


# TODO(synk): Policy.act()'s Categorical sampling / log_prob stays host-side
# (jax.random.categorical on the returned probabilities); it is not part of
# forward() and is not a kernel.

if __name__ == "__main__":
    key = jax.random.PRNGKey(0)
    kx, kp, kb, kc = jax.random.split(key, 4)

    # CartPole-v0: state_size=4, h_size=16, action_size=2.
    batch, state_size, h_size, action_size = 2, 4, 16, 2
    x = jax.random.normal(kx, (batch, state_size), jnp.float32)
    w1, b1, w2, b2 = init_params(kp, state_size, h_size, action_size)
    params = prepare_params(w1, b1, w2, b2)

    # Small batch (the `act` path uses batch=1; use 2 here).
    probs = policy_forward(x, params)
    jax.block_until_ready(probs)
    probs_ref = reference_forward(x, w1, b1, w2, b2)
    assert probs.shape == (batch, action_size)
    assert jnp.allclose(probs, probs_ref, atol=1e-4), "mismatch (small batch)"
    assert jnp.allclose(jnp.sum(probs, axis=1), 1.0, atol=1e-5)

    # Rollout-scale batch: one whole-batch tile (304 padded rows, nb=1).
    xb = jax.random.normal(kb, (300, state_size), jnp.float32)
    probs_b = policy_forward(xb, params)
    jax.block_until_ready(probs_b)
    assert probs_b.shape == (300, action_size)
    assert jnp.allclose(probs_b, reference_forward(xb, w1, b1, w2, b2),
                        atol=1e-4), "mismatch (rollout batch)"
    assert jnp.allclose(jnp.sum(probs_b, axis=1), 1.0, atol=1e-5)

    # Large batch exercising the multi-block grid (tb=512, nb=3, "parallel").
    xc = jax.random.normal(kc, (1500, state_size), jnp.float32)
    probs_c = policy_forward(xc, params)
    jax.block_until_ready(probs_c)
    assert probs_c.shape == (1500, action_size)
    assert jnp.allclose(probs_c, reference_forward(xc, w1, b1, w2, b2),
                        atol=1e-4), "mismatch (large batch)"
    assert jnp.allclose(jnp.sum(probs_c, axis=1), 1.0, atol=1e-5)

    print("KERNEL_OK")
</pallas_src>

<mosaic_0001>
module attributes {stable_mosaic.version = 11 : i64} {
  func.func @kernel(%arg0: i32, %arg1: memref<8x128xf32, #tpu.memory_space<vmem>>, %arg2: memref<8x128xf32, #tpu.memory_space<vmem>>, %arg3: memref<1x128xf32, #tpu.memory_space<vmem>>, %arg4: memref<8x128xf32, #tpu.memory_space<vmem>>, %arg5: memref<1x128xf32, #tpu.memory_space<vmem>>, %arg6: memref<8x128xf32, #tpu.memory_space<vmem>>, %arg7: memref<8x128xf32, #tpu.memory_space<vmem>>) attributes {dimension_semantics = [#tpu.dimension_semantics<parallel>], iteration_bounds = array<i64: 1>, scalar_prefetch = 0 : i64, scratch_operands = 1 : i64, tpu.core_type = #tpu.core_type<tc>, window_params = [{transform_indices = @transform_0, window_bounds = array<i64: 8, 128>}, {pipeline_mode = #tpu.pipeline_mode<synchronous>, transform_indices = @transform_1, window_bounds = array<i64: 8, 128>}, {pipeline_mode = #tpu.pipeline_mode<synchronous>, transform_indices = @transform_2, window_bounds = array<i64: 1, 128>}, {pipeline_mode = #tpu.pipeline_mode<synchronous>, transform_indices = @transform_3, window_bounds = array<i64: 8, 128>}, {pipeline_mode = #tpu.pipeline_mode<synchronous>, transform_indices = @transform_4, window_bounds = array<i64: 1, 128>}, {transform_indices = @transform_5, window_bounds = array<i64: 8, 128>}]} {
    %c0 = arith.constant 0 : index
    %c0_0 = arith.constant 0 : index
    %0 = vector.load %arg1[%c0, %c0_0] : memref<8x128xf32, #tpu.memory_space<vmem>>, vector<8x1xf32>
    %c0_1 = arith.constant 0 : index
    %c0_2 = arith.constant 0 : index
    %1 = vector.load %arg2[%c0_1, %c0_2] : memref<8x128xf32, #tpu.memory_space<vmem>>, vector<1x128xf32>
    %2 = vector.broadcast %0 : vector<8x1xf32> to vector<8x128xf32>
    %3 = vector.broadcast %1 : vector<1x128xf32> to vector<8x128xf32>
    %4 = arith.mulf %2, %3 : vector<8x128xf32>
    %c0_3 = arith.constant 0 : index
    %c0_4 = arith.constant 0 : index
    %5 = vector.load %arg3[%c0_3, %c0_4] : memref<1x128xf32, #tpu.memory_space<vmem>>, vector<1x128xf32>
    %6 = vector.broadcast %5 : vector<1x128xf32> to vector<8x128xf32>
    %7 = arith.addf %4, %6 : vector<8x128xf32>
    %c0_5 = arith.constant 0 : index
    %c0_6 = arith.constant 0 : index
    %8 = vector.load %arg7[%c0_5, %c0_6] : memref<8x128xf32, #tpu.memory_space<vmem>>, vector<8x128xf32>
    tpu.vector_store %arg7[%c0_5, %c0_6], %7 {strides = array<i32>} : memref<8x128xf32, #tpu.memory_space<vmem>>, vector<8x128xf32>,
    %c0_7 = arith.constant 0 : index
    %c1 = arith.constant 1 : index
    %9 = vector.load %arg1[%c0_7, %c1] : memref<8x128xf32, #tpu.memory_space<vmem>>, vector<8x1xf32>
    %c1_8 = arith.constant 1 : index
    %c0_9 = arith.constant 0 : index
    %10 = vector.load %arg2[%c1_8, %c0_9] : memref<8x128xf32, #tpu.memory_space<vmem>>, vector<1x128xf32>
    %11 = vector.broadcast %9 : vector<8x1xf32> to vector<8x128xf32>
    %12 = vector.broadcast %10 : vector<1x128xf32> to vector<8x128xf32>
    %13 = arith.mulf %11, %12 : vector<8x128xf32>
    %c0_10 = arith.constant 0 : index
    %c0_11 = arith.constant 0 : index
    %14 = vector.load %arg7[%c0_10, %c0_11] : memref<8x128xf32, #tpu.memory_space<vmem>>, vector<8x128xf32>
    %15 = arith.addf %14, %13 : vector<8x128xf32>
    %c0_12 = arith.constant 0 : index
    %c0_13 = arith.constant 0 : index
    %16 = vector.load %arg7[%c0_12, %c0_13] : memref<8x128xf32, #tpu.memory_space<vmem>>, vector<8x128xf32>
    tpu.vector_store %arg7[%c0_12, %c0_13], %15 {strides = array<i32>} : memref<8x128xf32, #tpu.memory_space<vmem>>, vector<8x128xf32>,
    %c0_14 = arith.constant 0 : index
    %c2 = arith.constant 2 : index
    %17 = vector.load %arg1[%c0_14, %c2] : memref<8x128xf32, #tpu.memory_space<vmem>>, vector<8x1xf32>
    %c2_15 = arith.constant 2 : index
    %c0_16 = arith.constant 0 : index
    %18 = vector.load %arg2[%c2_15, %c0_16] : memref<8x128xf32, #tpu.memory_space<vmem>>, vector<1x128xf32>
    %19 = vector.broadcast %17 : vector<8x1xf32> to vector<8x128xf32>
    %20 = vector.broadcast %18 : vector<1x128xf32> to vector<8x128xf32>
    %21 = arith.mulf %19, %20 : vector<8x128xf32>
    %c0_17 = arith.constant 0 : index
    %c0_18 = arith.constant 0 : index
    %22 = vector.load %arg7[%c0_17, %c0_18] : memref<8x128xf32, #tpu.memory_space<vmem>>, vector<8x128xf32>
    %23 = arith.addf %22, %21 : vector<8x128xf32>
    %c0_19 = arith.constant 0 : index
    %c0_20 = arith.constant 0 : index
    %24 = vector.load %arg7[%c0_19, %c0_20] : memref<8x128xf32, #tpu.memory_space<vmem>>, vector<8x128xf32>
    tpu.vector_store %arg7[%c0_19, %c0_20], %23 {strides = array<i32>} : memref<8x128xf32, #tpu.memory_space<vmem>>, vector<8x128xf32>,
    %c0_21 = arith.constant 0 : index
    %c3 = arith.constant 3 : index
    %25 = vector.load %arg1[%c0_21, %c3] : memref<8x128xf32, #tpu.memory_space<vmem>>, vector<8x1xf32>
    %c3_22 = arith.constant 3 : index
    %c0_23 = arith.constant 0 : index
    %26 = vector.load %arg2[%c3_22, %c0_23] : memref<8x128xf32, #tpu.memory_space<vmem>>, vector<1x128xf32>
    %27 = vector.broadcast %25 : vector<8x1xf32> to vector<8x128xf32>
    %28 = vector.broadcast %26 : vector<1x128xf32> to vector<8x128xf32>
    %29 = arith.mulf %27, %28 : vector<8x128xf32>
    %c0_24 = arith.constant 0 : index
    %c0_25 = arith.constant 0 : index
    %30 = vector.load %arg7[%c0_24, %c0_25] : memref<8x128xf32, #tpu.memory_space<vmem>>, vector<8x128xf32>
    %31 = arith.addf %30, %29 : vector<8x128xf32>
    %cst = arith.constant 0.000000e+00 : f32
    %32 = vector.broadcast %cst : f32 to vector<8x128xf32>
    %33 = arith.maximumf %31, %32 : vector<8x128xf32>
    %c0_26 = arith.constant 0 : index
    %c0_27 = arith.constant 0 : index
    %34 = vector.load %arg7[%c0_26, %c0_27] : memref<8x128xf32, #tpu.memory_space<vmem>>, vector<8x128xf32>
    tpu.vector_store %arg7[%c0_26, %c0_27], %33 {strides = array<i32>} : memref<8x128xf32, #tpu.memory_space<vmem>>, vector<8x128xf32>,
    %c0_28 = arith.constant 0 : index
    %c0_29 = arith.constant 0 : index
    %35 = vector.load %arg7[%c0_28, %c0_29] : memref<8x128xf32, #tpu.memory_space<vmem>>, vector<8x128xf32>
    %c0_30 = arith.constant 0 : index
    %c0_31 = arith.constant 0 : index
    %36 = vector.load %arg4[%c0_30, %c0_31] : memref<8x128xf32, #tpu.memory_space<vmem>>, vector<1x128xf32>
    %37 = vector.broadcast %36 : vector<1x128xf32> to vector<8x128xf32>
    %38 = arith.mulf %35, %37 : vector<8x128xf32>
    %cst_32 = arith.constant dense<0.000000e+00> : vector<8xf32>
    %39 = vector.multi_reduction <add>, %38, %cst_32 [1] : vector<8x128xf32> to vector<8xf32>
    %40 = vector.shape_cast %39 : vector<8xf32> to vector<8x1xf32>
    %c0_33 = arith.constant 0 : index
    %c0_34 = arith.constant 0 : index
    %41 = vector.load %arg5[%c0_33, %c0_34] : memref<1x128xf32, #tpu.memory_space<vmem>>, vector<1x1xf32>
    %42 = vector.broadcast %41 : vector<1x1xf32> to vector<8x1xf32>
    %43 = arith.addf %40, %42 : vector<8x1xf32>
    %c0_35 = arith.constant 0 : index
    %c0_36 = arith.constant 0 : index
    %44 = vector.load %arg7[%c0_35, %c0_36] : memref<8x128xf32, #tpu.memory_space<vmem>>, vector<8x128xf32>
    %c1_37 = arith.constant 1 : index
    %c0_38 = arith.constant 0 : index
    %45 = vector.load %arg4[%c1_37, %c0_38] : memref<8x128xf32, #tpu.memory_space<vmem>>, vector<1x128xf32>
    %46 = vector.broadcast %45 : vector<1x128xf32> to vector<8x128xf32>
    %47 = arith.mulf %44, %46 : vector<8x128xf32>
    %cst_39 = arith.constant dense<0.000000e+00> : vector<8xf32>
    %48 = vector.multi_reduction <add>, %47, %cst_39 [1] : vector<8x128xf32> to vector<8xf32>
    %49 = vector.shape_cast %48 : vector<8xf32> to vector<8x1xf32>
    %c0_40 = arith.constant 0 : index
    %c1_41 = arith.constant 1 : index
    %50 = vector.load %arg5[%c0_40, %c1_41] : memref<1x128xf32, #tpu.memory_space<vmem>>, vector<1x1xf32>
    %51 = vector.broadcast %50 : vector<1x1xf32> to vector<8x1xf32>
    %52 = arith.addf %49, %51 : vector<8x1xf32>
    %53 = tpu.iota {dimensions = array<i32: 1>} : vector<8x128xi32>
    %54 = arith.subf %52, %43 : vector<8x1xf32>
    %55 = math.exp %54 : vector<8x1xf32>
    %cst_42 = arith.constant 1.000000e+00 : f32
    %56 = vector.broadcast %cst_42 : f32 to vector<8x1xf32>
    %57 = arith.addf %56, %55 : vector<8x1xf32>
    %cst_43 = arith.constant 1.000000e+00 : f32
    %58 = vector.broadcast %cst_43 : f32 to vector<8x1xf32>
    %59 = arith.divf %58, %57 : vector<8x1xf32>
    %cst_44 = arith.constant 1.000000e+00 : f32
    %60 = vector.broadcast %cst_44 : f32 to vector<8x1xf32>
    %61 = arith.subf %60, %59 : vector<8x1xf32>
    %c0_i32 = arith.constant 0 : i32
    %62 = vector.broadcast %c0_i32 : i32 to vector<8x128xi32>
    %63 = arith.cmpi eq, %53, %62 : vector<8x128xi32>
    %c1_i32 = arith.constant 1 : i32
    %64 = vector.broadcast %c1_i32 : i32 to vector<8x128xi32>
    %65 = arith.cmpi eq, %53, %64 : vector<8x128xi32>
    %cst_45 = arith.constant 0.000000e+00 : f32
    %66 = vector.shape_cast %61 : vector<8x1xf32> to vector<8x1xf32>
    %67 = vector.broadcast %66 : vector<8x1xf32> to vector<8x128xf32>
    %68 = vector.broadcast %cst_45 : f32 to vector<8x128xf32>
    %69 = arith.select %65, %67, %68 : vector<8x128xi1>, vector<8x128xf32>
    %70 = vector.shape_cast %59 : vector<8x1xf32> to vector<8x1xf32>
    %71 = vector.broadcast %70 : vector<8x1xf32> to vector<8x128xf32>
    %72 = arith.select %63, %71, %69 : vector<8x128xi1>, vector<8x128xf32>
    %c0_46 = arith.constant 0 : index
    %c0_47 = arith.constant 0 : index
    %73 = vector.load %arg6[%c0_46, %c0_47] : memref<8x128xf32, #tpu.memory_space<vmem>>, vector<8x128xf32>
    tpu.vector_store %arg6[%c0_46, %c0_47], %72 {strides = array<i32>} : memref<8x128xf32, #tpu.memory_space<vmem>>, vector<8x128xf32>,
    return
  }
  func.func @transform_0(%arg0: i32) -> (i32, i32) {
    %c0_i32 = arith.constant 0 : i32
    %c0_i32_0 = arith.constant 0 : i32
    return %arg0, %c0_i32 : i32, i32
  }
  func.func @transform_1(%arg0: i32) -> (i32, i32) {
    %c0_i32 = arith.constant 0 : i32
    %c0_i32_0 = arith.constant 0 : i32
    %c0_i32_1 = arith.constant 0 : i32
    return %c0_i32, %c0_i32_0 : i32, i32
  }
  func.func @transform_2(%arg0: i32) -> (i32, i32) {
    %c0_i32 = arith.constant 0 : i32
    %c0_i32_0 = arith.constant 0 : i32
    %c0_i32_1 = arith.constant 0 : i32
    return %c0_i32, %c0_i32_0 : i32, i32
  }
  func.func @transform_3(%arg0: i32) -> (i32, i32) {
    %c0_i32 = arith.constant 0 : i32
    %c0_i32_0 = arith.constant 0 : i32
    %c0_i32_1 = arith.constant 0 : i32
    return %c0_i32, %c0_i32_0 : i32, i32
  }
  func.func @transform_4(%arg0: i32) -> (i32, i32) {
    %c0_i32 = arith.constant 0 : i32
    %c0_i32_0 = arith.constant 0 : i32
    %c0_i32_1 = arith.constant 0 : i32
    return %c0_i32, %c0_i32_0 : i32, i32
  }
  func.func @transform_5(%arg0: i32) -> (i32, i32) {
    %c0_i32 = arith.constant 0 : i32
    %c0_i32_0 = arith.constant 0 : i32
    return %arg0, %c0_i32 : i32, i32
  }
}

</mosaic_0001>

<llo_original>
// kernel: _policy_forward_impl.1
$region0: #{_policy_forward_impl.1}
  #allocation0 [shape = 'u32[]', space=smem, size = 0x4, offset = 0x4, fixed_abs, tag = 'smem constant byte address 0x4 - core index']
  #allocation1 [shape = 'u32[144,128]{1,0:T(1,128)}', space=vmem, size = 0x12000, scoped, tag = 'internal scratch']
  #allocation2 [shape = 'f32[8,128]{1,0:T(8,128)}', space=vmem, size = 0x1000, scoped, tag = 'scratch operand']
  %s0 = inlined_call_operand.vmem [shape: f32[8,128], index: 0, kind: input, shape index: {}]
  %s1 = inlined_call_operand.vmem [shape: f32[8,128], index: 1, kind: input, shape index: {}]
  %s2 = inlined_call_operand.vmem [shape: f32[1,128], index: 2, kind: input, shape index: {}]
  %s3 = inlined_call_operand.vmem [shape: f32[8,128], index: 3, kind: input, shape index: {}]
  %s4 = inlined_call_operand.vmem [shape: f32[1,128], index: 4, kind: input, shape index: {}]
  %s5 = inlined_call_operand.vmem [shape: f32[8,128], index: 5, kind: output, shape index: {}]
  %s6 = sld [smem:[#allocation0]]
  $region30: #{_policy_forward_impl.1} parent=0
    _
  %s8 = ssub.s32 1, %s6
  %s9 = scalar_select 0, %s8, %s6
  // Predicated region
  $region2: #{_policy_forward_impl.1} parent=0 // pred_check
    _
  $region3: #{_policy_forward_impl.1} parent=0 // pred_check_branch
    %11 = sbr.rel (0) target = $region5
  $region4: #{_policy_forward_impl.1} parent=0 // pred_region
    _
  $region5: #{_policy_forward_impl.1} parent=0 // pred_fallthru
    _
  // Predicated region
  $region6: #{_policy_forward_impl.1} parent=0 // pred_check
    _
  $region7: #{_policy_forward_impl.1} parent=0 // pred_check_branch
    %13 = sbr.rel (0) target = $region9
  $region8: #{_policy_forward_impl.1} parent=0 // pred_region
    _
  $region9: #{_policy_forward_impl.1} parent=0 // pred_fallthru
    _
  // Predicated region
  $region10: #{_policy_forward_impl.1} parent=0 // pred_check
    _
  $region11: #{_policy_forward_impl.1} parent=0 // pred_check_branch
    %15 = sbr.rel (0) target = $region13
  $region12: #{_policy_forward_impl.1} parent=0 // pred_region
    _
  $region13: #{_policy_forward_impl.1} parent=0 // pred_fallthru
    _
  // Predicated region
  $region14: #{_policy_forward_impl.1} parent=0 // pred_check
    _
  $region15: #{_policy_forward_impl.1} parent=0 // pred_check_branch
    %17 = sbr.rel (0) target = $region17
  $region16: #{_policy_forward_impl.1} parent=0 // pred_region
    _
  $region17: #{_policy_forward_impl.1} parent=0 // pred_fallthru
    _
  // Predicated region
  $region18: #{_policy_forward_impl.1} parent=0 // pred_check
    _
  $region19: #{_policy_forward_impl.1} parent=0 // pred_check_branch
    %19 = sbr.rel (0) target = $region21
  $region20: #{_policy_forward_impl.1} parent=0 // pred_region
    _
  $region21: #{_policy_forward_impl.1} parent=0 // pred_fallthru
    _
  %v20 = vld [vmem:[%s0] sm:$0xff]
  %v21 = vld [vmem:[%s1] sm:$0x1]
  %23 = vset.pattern.permute.xlu0 0
  %24 = vperm.xlu0 %23, %v20
  %v25 = vpop.permute.xlu0 %24
  %v27 = vlaneseq
  %v28 = vshrl.u32 %v27, 7
  %v29 = vsub.s32 0, %v28
  %v30 = vrot.slane %v21, %v29
  %v31 = vmul.f32 %v25, %v30
  %v32 = vld [vmem:[%s2] sm:$0x1]
  %v34 = vlaneseq
  %v35 = vshrl.u32 %v34, 7
  %v36 = vsub.s32 0, %v35
  %v37 = vrot.slane %v32, %v36
  %v39 = vadd.f32 %v31, %v37
  %40 = vst [vmem:[#allocation2] sm:$0xff] %v39
  %v41 = vld [vmem:[%s0] sm:$0xff]
  %v42 = vld [vmem:[%s1 + $0x1] sm:$0x1]
  %44 = vset.pattern.permute.xlu0 1
  %45 = vperm.xlu0 %44, %v41
  %v46 = vpop.permute.xlu0 %45
  %v48 = vlaneseq
  %v49 = vshrl.u32 %v48, 7
  %v50 = vsub.s32 0, %v49
  %v51 = vrot.slane %v42, %v50
  %v52 = vmul.f32 %v46, %v51
  %v53 = vld [vmem:[#allocation2] sm:$0xff]
  %v54 = vadd.f32 %v53, %v52
  %55 = vst [vmem:[#allocation2] sm:$0xff] %v54
  %v56 = vld [vmem:[%s0] sm:$0xff]
  %v57 = vld [vmem:[%s1 + $0x2] sm:$0x1]
  %59 = vset.pattern.permute.xlu0 2
  %60 = vperm.xlu0 %59, %v56
  %v61 = vpop.permute.xlu0 %60
  %v63 = vlaneseq
  %v64 = vshrl.u32 %v63, 7
  %v65 = vsub.s32 0, %v64
  %v66 = vrot.slane %v57, %v65
  %v67 = vmul.f32 %v61, %v66
  %v68 = vld [vmem:[#allocation2] sm:$0xff]
  %v69 = vadd.f32 %v68, %v67
  %70 = vst [vmem:[#allocation2] sm:$0xff] %v69
  %v71 = vld [vmem:[%s0] sm:$0xff]
  %v72 = vld [vmem:[%s1 + $0x3] sm:$0x1]
  %74 = vset.pattern.permute.xlu0 3
  %75 = vperm.xlu0 %74, %v71
  %v76 = vpop.permute.xlu0 %75
  %v78 = vlaneseq
  %v79 = vshrl.u32 %v78, 7
  %v80 = vsub.s32 0, %v79
  %v81 = vrot.slane %v72, %v80
  %v82 = vmul.f32 %v76, %v81
  %v83 = vld [vmem:[#allocation2] sm:$0xff]
  %v84 = vadd.f32 %v83, %v82
  %v85 = vmax.f32 %v84, 0.0
  %86 = vst [vmem:[#allocation2] sm:$0xff] %v85
  %v87 = vld [vmem:[#allocation2] sm:$0xff]
  %v88 = vld [vmem:[%s3] sm:$0x1]
  %v89 = vlaneseq
  %v90 = vshrl.u32 %v89, 7
  %v91 = vsub.s32 0, %v90
  %v92 = vrot.slane %v88, %v91
  %v93 = vmul.f32 %v87, %v92
  %94 = vadd.xlane.f32.xlu0 %v93
  %v95 = vpop.xlane.xlu0 %94
  %v96 = vld [vmem:[%s4] sm:$0x1]
  %v98 = vlaneseq
  %v99 = vshrl.u32 %v98, 7
  %v100 = vsub.s32 0, %v99
  %v101 = vrot.slane %v96, %v100
  %v103 = vadd.f32 %v95, %v101
  %v104 = vld [vmem:[%s3 + $0x1] sm:$0x1]
  %v105 = vlaneseq
  %v106 = vshrl.u32 %v105, 7
  %v107 = vsub.s32 0, %v106
  %v108 = vrot.slane %v104, %v107
  %v109 = vmul.f32 %v87, %v108
  %110 = vadd.xlane.f32.xlu0 %v109
  %v111 = vpop.xlane.xlu0 %110
  %v112 = vadd.f32 %v111, %v101
  %v113 = vlaneseq
  %v114 = vand.u32 %v113, 127
  %116 = vrot.lane.b32.xlu0 %v103, 1
  %v117 = vpop.permute.xlu0 %116
  %v119 = vsub.f32 %v112, %v117
  %v120 = vmul.f32 %v119, 1.442695
  %v121 = vpow.pop %v120
  %v122 = vadd.f32 %v121, 1.0
  %v123 = vrcp.pop %v122
  %v124 = vmul.f32 1.0, %v123
  %v125 = vsub.f32 1.0, %v124
  %vm126 = vcmp.eq.s32.totalorder %v114, 0
  %vm127 = vcmp.eq.s32.totalorder %v114, 1
  %129 = vset.pattern.permute.xlu0 1
  %130 = vperm.xlu0 %129, %v125
  %v131 = vpop.permute.xlu0 %130
  %v133 = vsel %vm127, %v131, 0.0
  %135 = vset.pattern.permute.xlu0 1
  %136 = vperm.xlu0 %135, %v124
  %v137 = vpop.permute.xlu0 %136
  %v139 = vsel %vm126, %v137, %v133
  %140 = vst [vmem:[%s5] sm:$0xff] %v139
  // Predicated region
  $region22: #{_policy_forward_impl.1} parent=0 // pred_check
    _
  $region23: #{_policy_forward_impl.1} parent=0 // pred_check_branch
    %142 = sbr.rel (0) target = $region25
  $region24: #{_policy_forward_impl.1} parent=0 // pred_region
    _
  $region25: #{_policy_forward_impl.1} parent=0 // pred_fallthru
    _
  // Predicated region
  $region26: #{_policy_forward_impl.1} parent=0 // pred_check
    _
  $region27: #{_policy_forward_impl.1} parent=0 // pred_check_branch
    %144 = sbr.rel (0) target = $region29
  $region28: #{_policy_forward_impl.1} parent=0 // pred_region
    _
  $region29: #{_policy_forward_impl.1} parent=0 // pred_fallthru
    _

</llo_original>
